<compile_context>
chip_gen: v5e
topology: v5e:2x2
jax: 0.10.0
libtpu: 0.0.40
codegen_flags: <defaults>
</compile_context>

<pallas_src>
import functools
import numpy as np
import jax
import jax.numpy as jnp
from jax.experimental import pallas as pl
from jax.experimental.pallas import tpu as pltpu


def _round_up(a: int, b: int) -> int:
    return ((a + b - 1) // b) * b


# ------------------------------- the kernel -------------------------------

def _fc_kernel(x_ref, w_ref, b_ref, o_ref, *, activation, dropout_rate, training, seed):
    x = x_ref[...].astype(jnp.float32)                       # (tm, K)

    if training and dropout_rate > 0.0:
        # Inverted dropout, seeded per grid step so every row-tile draws fresh bits.
        pltpu.prng_seed(seed + pl.program_id(0))
        bits = pltpu.bitcast(pltpu.prng_random_bits(x.shape), jnp.uint32)
        u = (bits >> jnp.uint32(8)).astype(jnp.float32) * jnp.float32(1.0 / (1 << 24))
        keep = (u >= jnp.float32(dropout_rate)).astype(jnp.float32)
        x = x * keep * jnp.float32(1.0 / (1.0 - dropout_rate))

    # Linear on the MXU, bias add + tanh fused on VPU/EUP.
    y = jnp.dot(x, w_ref[...], preferred_element_type=jnp.float32)   # (tm, N)
    y = y + b_ref[...]
    if activation:
        y = jnp.tanh(y)
    o_ref[...] = y.astype(o_ref.dtype)


# ------------------------------ host wrapper -------------------------------

def fc_layer_forward(x, weight, bias, *, activation=True, dropout_rate=0.0,
                     training=False, seed=0, block_m=256):
    """Equivalent of FClayer.forward: tanh(dropout(x) @ W.T + b) (tanh optional).

    x: [..., input_dim], weight: [hidden, input_dim], bias: [hidden].
    Returns [..., hidden].
    """
    *lead, K = x.shape
    N = weight.shape[0]
    M = int(np.prod(lead)) if lead else 1

    x2 = jnp.asarray(x, jnp.float32).reshape(M, K)
    w_t = jnp.asarray(weight, jnp.float32).T                 # (K, N)
    b2 = jnp.asarray(bias, jnp.float32).reshape(1, N)

    # Sublane-aligned row tiles; pad M up to a multiple of the tile.
    tm = min(_round_up(block_m, 8), _round_up(M, 8))
    Mp = _round_up(M, tm)
    if Mp != M:
        x2 = jnp.pad(x2, ((0, Mp - M), (0, 0)))
    grid = (Mp // tm,)

    kernel = functools.partial(
        _fc_kernel,
        activation=bool(activation),
        dropout_rate=float(dropout_rate),
        training=bool(training),
        seed=int(seed),
    )

    out = pl.pallas_call(
        kernel,
        out_shape=jax.ShapeDtypeStruct((Mp, N), jnp.float32),
        grid=grid,
        in_specs=[
            pl.BlockSpec((tm, K), lambda i: (i, 0)),   # streamed x row-tile
            pl.BlockSpec((K, N), lambda i: (0, 0)),    # W.T, VMEM-resident
            pl.BlockSpec((1, N), lambda i: (0, 0)),    # bias, VMEM-resident
        ],
        out_specs=pl.BlockSpec((tm, N), lambda i: (i, 0)),
        compiler_params=pltpu.CompilerParams(
            dimension_semantics=("parallel",)),        # shard row tiles across TCs (v7x)
    )(x2, w_t, b2)

    out = out[:M]
    return out.reshape(*lead, N) if lead else out.reshape(N)


# ---------------------------------- main ------------------------------------

if __name__ == "__main__":
    input_dim, hidden_size = 32, 100
    B, T = 2, 8

    key = jax.random.PRNGKey(0)
    kx, kw, kb = jax.random.split(key, 3)

    x = jax.random.normal(kx, (B, T, input_dim), dtype=jnp.float32)
    bound = 1.0 / np.sqrt(input_dim)
    weight = jax.random.uniform(kw, (hidden_size, input_dim), dtype=jnp.float32,
                                minval=-bound, maxval=bound)
    bias = jax.random.uniform(kb, (hidden_size,), dtype=jnp.float32,
                              minval=-bound, maxval=bound)

    # activation=True (default FClayer config: dropout(p=0) -> linear -> tanh).
    y = fc_layer_forward(x, weight, bias, activation=True)
    jax.block_until_ready(y)
    ref = np.tanh(np.asarray(x) @ np.asarray(weight).T + np.asarray(bias))
    np.testing.assert_allclose(np.asarray(y), ref, rtol=1e-4, atol=1e-4)

    # activation=False path (raw linear output).
    y2 = fc_layer_forward(x, weight, bias, activation=False)
    jax.block_until_ready(y2)
    ref2 = np.asarray(x) @ np.asarray(weight).T + np.asarray(bias)
    np.testing.assert_allclose(np.asarray(y2), ref2, rtol=1e-4, atol=1e-4)

    # TODO(synk): training-mode dropout (p>0) uses the TPU PRNG and is sampled
    # independently of torch's RNG, so it is validated only statistically, not
    # bit-for-bit against nn.Dropout.

    print("KERNEL_OK")
</pallas_src>

<mosaic_0001>
module attributes {stable_mosaic.version = 11 : i64} {
  func.func @_fc_kernel(%arg0: i32, %arg1: memref<16x32xf32, #tpu.memory_space<vmem>>, %arg2: memref<32x100xf32, #tpu.memory_space<vmem>>, %arg3: memref<1x100xf32, #tpu.memory_space<vmem>>, %arg4: memref<16x100xf32, #tpu.memory_space<vmem>>) attributes {dimension_semantics = [#tpu.dimension_semantics<parallel>], iteration_bounds = array<i64: 1>, scalar_prefetch = 0 : i64, scratch_operands = 0 : i64, tpu.core_type = #tpu.core_type<tc>, window_params = [{transform_indices = @transform_0, window_bounds = array<i64: 16, 32>}, {pipeline_mode = #tpu.pipeline_mode<synchronous>, transform_indices = @transform_1, window_bounds = array<i64: 32, 100>}, {pipeline_mode = #tpu.pipeline_mode<synchronous>, transform_indices = @transform_2, window_bounds = array<i64: 1, 100>}, {transform_indices = @transform_3, window_bounds = array<i64: 16, 100>}]} {
    %c0 = arith.constant 0 : index
    %c0_0 = arith.constant 0 : index
    %0 = vector.load %arg1[%c0, %c0_0] : memref<16x32xf32, #tpu.memory_space<vmem>>, vector<16x32xf32>
    %c0_1 = arith.constant 0 : index
    %c0_2 = arith.constant 0 : index
    %1 = vector.load %arg2[%c0_1, %c0_2] : memref<32x100xf32, #tpu.memory_space<vmem>>, vector<32x100xf32>
    %cst = arith.constant dense<0.000000e+00> : vector<16x100xf32>
    %2 = tpu.matmul %0, %1, %cst {dimension_numbers = #tpu.dot_dimension_numbers<[1], [0], [0], [1], [0, 0, 1, 1], [], []>} : vector<16x32xf32>, vector<32x100xf32>, vector<16x100xf32> -> vector<16x100xf32>
    %c0_3 = arith.constant 0 : index
    %c0_4 = arith.constant 0 : index
    %3 = vector.load %arg3[%c0_3, %c0_4] : memref<1x100xf32, #tpu.memory_space<vmem>>, vector<1x100xf32>
    %4 = vector.broadcast %3 : vector<1x100xf32> to vector<16x100xf32>
    %5 = arith.addf %2, %4 : vector<16x100xf32>
    %6 = math.tanh %5 : vector<16x100xf32>
    %c0_5 = arith.constant 0 : index
    %c0_6 = arith.constant 0 : index
    %7 = vector.load %arg4[%c0_5, %c0_6] : memref<16x100xf32, #tpu.memory_space<vmem>>, vector<16x100xf32>
    tpu.vector_store %arg4[%c0_5, %c0_6], %6 {strides = array<i32>} : memref<16x100xf32, #tpu.memory_space<vmem>>, vector<16x100xf32>,
    return
  }
  func.func @transform_0(%arg0: i32) -> (i32, i32) {
    %c0_i32 = arith.constant 0 : i32
    %c0_i32_0 = arith.constant 0 : i32
    return %arg0, %c0_i32 : i32, i32
  }
  func.func @transform_1(%arg0: i32) -> (i32, i32) {
    %c0_i32 = arith.constant 0 : i32
    %c0_i32_0 = arith.constant 0 : i32
    %c0_i32_1 = arith.constant 0 : i32
    return %c0_i32, %c0_i32_0 : i32, i32
  }
  func.func @transform_2(%arg0: i32) -> (i32, i32) {
    %c0_i32 = arith.constant 0 : i32
    %c0_i32_0 = arith.constant 0 : i32
    %c0_i32_1 = arith.constant 0 : i32
    return %c0_i32, %c0_i32_0 : i32, i32
  }
  func.func @transform_3(%arg0: i32) -> (i32, i32) {
    %c0_i32 = arith.constant 0 : i32
    %c0_i32_0 = arith.constant 0 : i32
    return %arg0, %c0_i32 : i32, i32
  }
}

</mosaic_0001>

<llo_original>
// kernel: tpu_custom_call.1
$region0: #{tpu_custom_call.1}
  #allocation0 [shape = 'u32[]', space=smem, size = 0x4, offset = 0x4, fixed_abs, tag = 'smem constant byte address 0x4 - core index']
  #allocation1 [shape = 'u32[72,128]{1,0:T(1,128)}', space=vmem, size = 0x9000, scoped, tag = 'internal scratch']
  %s0 = inlined_call_operand.hbm [shape: f32[16,32], index: 0, kind: input, shape index: {}]
  %s1 = inlined_call_operand.hbm [shape: f32[32,100], index: 1, kind: input, shape index: {}]
  %s2 = inlined_call_operand.vmem [shape: f32[1,100], index: 2, kind: input, shape index: {}]
  %s3 = inlined_call_operand.hbm [shape: f32[16,100], index: 3, kind: output, shape index: {}]
  %s4 = sld [smem:[#allocation0]]
  $region30: #{tpu_custom_call.1} parent=0
    _
  %s6 = ssub.s32 1, %s4
  %s7 = scalar_select 0, %s6, %s4
  $region1: #{tpu_custom_call.1} parent=0
    #allocation2 [shape = 'u8[8192]{0}', space=vmem, size = 0x2000, scoped, tag = 'input window, operand 0, single buffered']
    #allocation3 [shape = 's32[1]{0}', space=sflag, size = 0x4, scoped, tag = 'scoped memory for tpu_custom_call.1']
    #allocation4 [shape = 's32[1]{0}', space=sflag, size = 0x4, scoped, tag = 'scoped memory for tpu_custom_call.1']
    #allocation5 [shape = 'u8[16384]{0}', space=vmem, size = 0x4000, scoped, tag = 'input window, operand 1, single buffered']
    #allocation6 [shape = 's32[1]{0}', space=sflag, size = 0x4, scoped, tag = 'scoped memory for tpu_custom_call.1']
    #allocation7 [shape = 'u8[8192]{0}', space=vmem, size = 0x2000, scoped, tag = 'output window, operand 0, single buffered']
    %8 = vsyncpa [#allocation3], 0
    %9 = vsyncpa [#allocation6], 0
    %10 = vsyncpa [#allocation4], 0
    // Predicated region
    $region2: #{tpu_custom_call.1} parent=1 // pred_check
      _
    $region3: #{tpu_custom_call.1} parent=1 // pred_check_branch
      %12 = sbr.rel (0) target = $region5
    $region4: #{tpu_custom_call.1} parent=1 // pred_region
      %14 = vsyncadd [#allocation3], 0
      %s15 = sshll.u32 %s0, 4
      %s16 = int_to_ptr.hbm [resolvable:$true] %s15
      %s17 = sshll.u32 [#allocation2], 4
      %s18 = int_to_ptr.vmem [resolvable:$true] %s17
      %23 = dma.hbm_to_vmem [thread:$0]  %s16, 256, %s18, [#allocation3], 128, 128, 8
    $region5: #{tpu_custom_call.1} parent=1 // pred_fallthru
      _
    // Predicated region
    $region6: #{tpu_custom_call.1} parent=1 // pred_check
      _
    $region7: #{tpu_custom_call.1} parent=1 // pred_check_branch
      %25 = sbr.rel (0) target = $region9
    $region8: #{tpu_custom_call.1} parent=1 // pred_region
      %27 = vsyncadd [#allocation6], 0
      %s28 = sshll.u32 %s1, 4
      %s29 = int_to_ptr.hbm [resolvable:$true] %s28
      %s30 = sshll.u32 [#allocation5], 4
      %s31 = int_to_ptr.vmem [resolvable:$true] %s30
      %36 = dma.hbm_to_vmem [thread:$0]  %s29, 512, %s31, [#allocation6], 128, 128, 8
    $region9: #{tpu_custom_call.1} parent=1 // pred_fallthru
      _
    // Predicated region
    $region10: #{tpu_custom_call.1} parent=1 // pred_check
      _
    $region11: #{tpu_custom_call.1} parent=1 // pred_check_branch
      %38 = sbr.rel (0) target = $region13
    $region12: #{tpu_custom_call.1} parent=1 // pred_region
      _
    $region13: #{tpu_custom_call.1} parent=1 // pred_fallthru
      _
    // Predicated region
    $region14: #{tpu_custom_call.1} parent=1 // pred_check
      _
    $region15: #{tpu_custom_call.1} parent=1 // pred_check_branch
      %40 = sbr.rel (0) target = $region17
    $region16: #{tpu_custom_call.1} parent=1 // pred_region
      %42 = dma.done [#allocation3], 256
    $region17: #{tpu_custom_call.1} parent=1 // pred_fallthru
      _
    // Predicated region
    $region18: #{tpu_custom_call.1} parent=1 // pred_check
      _
    $region19: #{tpu_custom_call.1} parent=1 // pred_check_branch
      %44 = sbr.rel (0) target = $region21
    $region20: #{tpu_custom_call.1} parent=1 // pred_region
      %46 = dma.done [#allocation6], 512
    $region21: #{tpu_custom_call.1} parent=1 // pred_fallthru
      _
    %v47 = vld [vmem:[#allocation2] sm:$0xff]
    %v48 = vld [vmem:[#allocation2 + $0x8] sm:$0xff]
    %v49 = vld [vmem:[#allocation5] sm:$0xff]
    %v50 = vld [vmem:[#allocation5 + $0x8] sm:$0xff]
    %v51 = vld [vmem:[#allocation5 + $0x10] sm:$0xff]
    %v52 = vld [vmem:[#allocation5 + $0x18] sm:$0xff]
    %v53 = vld [vmem:[%s2] sm:$0x1]
    %v55 = vperm.slane %v53, 0
    %vm57 = vcmask 261120
    %v59 = vsel %vm57, %v47, 0
    %v62 = vsel %vm57, %v48, 0
    %64 = vmatpush.msra.mxu0 0.0
    %65 = vmatpush.msra.mxu0 0.0
    %66 = vmatpush.msra.mxu0 0.0
    %67 = vmatpush.msra.mxu0 0.0
    %68 = vmatpush.msra.mxu0 0.0
    %69 = vmatpush.msra.mxu0 0.0
    %70 = vmatpush.msra.mxu0 0.0
    %71 = vmatpush.msra.mxu0 0.0
    %72 = vmatpush.msra.mxu0 0.0
    %73 = vmatpush.msra.mxu0 0.0
    %74 = vmatpush.msra.mxu0 0.0
    %75 = vmatpush.msra.mxu0 0.0
    %76 = vmatpush.msra.mxu0 %v52
    %77 = vmatpush.msra.mxu0 %v51
    %78 = vmatpush.msra.mxu0 %v50
    %79 = vmatpush.msra.mxu0 %v49
    %80 = vmatmul.f32.gmra.mxu0 %v59
    %v81 = vpop.f32.mrf.mxu0
    %v82 = vadd.f32 %v55, %v81
    %83 = vmatmul.f32.gmra.mxu0 %v62
    %v84 = vpop.f32.mrf.mxu0
    %v85 = vadd.f32 %v55, %v84
    %86 = vdwg.mxu0
    %v87 = vtanh.pop %v82
    %v88 = vtanh.pop %v85
    %vm89 = vcmask 818176
    %90 = vst.msk [vmem:[#allocation7] sm:$0xff] %vm89, %v87
    %91 = vst.msk [vmem:[#allocation7 + $0x8] sm:$0xff] %vm89, %v88
    // Predicated region
    $region22: #{tpu_custom_call.1} parent=1 // pred_check
      _
    $region23: #{tpu_custom_call.1} parent=1 // pred_check_branch
      %93 = sbr.rel (0) target = $region25
    $region24: #{tpu_custom_call.1} parent=1 // pred_region
      %95 = vsyncadd [#allocation4], 0
      %s96 = sshll.u32 [#allocation7], 4
      %s97 = int_to_ptr.vmem [resolvable:$true] %s96
      %s98 = sshll.u32 %s3, 4
      %s99 = int_to_ptr.hbm [resolvable:$true] %s98
      %104 = dma.vmem_to_hbm [thread:$0]  %s97, 256, %s99, [#allocation4], 128, 128, 8
    $region25: #{tpu_custom_call.1} parent=1 // pred_fallthru
      _
    // Predicated region
    $region26: #{tpu_custom_call.1} parent=1 // pred_check
      _
    $region27: #{tpu_custom_call.1} parent=1 // pred_check_branch
      %106 = sbr.rel (0) target = $region29
    $region28: #{tpu_custom_call.1} parent=1 // pred_region
      %108 = dma.done [#allocation4], 256
    $region29: #{tpu_custom_call.1} parent=1 // pred_fallthru
      _
    %109 = vsyncpa [#allocation3], 1
    %110 = vsyncpa [#allocation6], 1
    %111 = vsyncpa [#allocation4], 1

</llo_original>
